<compile_context>
chip_gen: v7x
topology: tpu7x:2x2x1
jax: 0.10.0
libtpu: 0.0.40
codegen_flags: <defaults>
</compile_context>

<pallas_src>
from functools import partial

import jax
import jax.numpy as jnp
from jax.experimental import pallas as pl
from jax.experimental.pallas import tpu as pltpu


def _channel_attention_kernel(x_ref, w1t_ref, w2t_ref, out_ref, attn_ref):
    # x_ref:    (bb, C, L)  input activation block
    # w1t_ref:  (C, H)      fc1 weight (Conv1d (H, C, 1) squeezed, pre-transposed), H = 32
    # w2t_ref:  (H, C)      fc2 weight (Conv1d (C, H, 1) squeezed, pre-transposed)
    # out_ref:  (bb, C, L)  x * (1 + attention)   (== x + attention * x)
    # attn_ref: (bb, C)     channel attention (reshaped to (B, C, 1) in the wrapper)
    x = x_ref[...]                                           # (bb, C, L)
    bb = x.shape[0]
    inv_l = 1.0 / x.shape[-1]
    xf = x.astype(jnp.float32)                               # f32 compute (v5e VPU-friendly)

    avg = jnp.sum(xf, axis=-1) * inv_l                       # (bb, C)  avg-pool over L
    mx = jnp.max(xf, axis=-1)                                # (bb, C)  max-pool over L

    # Batch both pooled vectors through fc1 in one MXU pass: M = 2*bb.
    pooled = jnp.concatenate([avg, mx], axis=0)              # (2*bb, C)
    h = jnp.maximum(
        jnp.dot(pooled, w1t_ref[...], preferred_element_type=jnp.float32), 0.0)  # (2*bb, H)

    # fc2 is linear and bias-free: fc2(relu_avg) + fc2(relu_max) == fc2(relu_avg + relu_max).
    h_sum = h[:bb] + h[bb:]                                  # (bb, H)
    logits = jnp.dot(h_sum, w2t_ref[...], preferred_element_type=jnp.float32)    # (bb, C)

    attention = jax.nn.sigmoid(logits)                       # (bb, C)
    attn_ref[...] = attention.astype(attn_ref.dtype)

    # out = x + a*x == x * (1 + a): halves VALU work per x vreg.  The [:, :, None] broadcast
    # relayouts only ~1-2 vregs (C lanes -> sublanes); that lands on the otherwise-idle XLU
    # slot and is negligible next to the lane-dense store of out.
    scale = (1.0 + attention)[:, :, None]                    # (bb, C, 1)
    out_ref[...] = (xf * scale).astype(out_ref.dtype)


def prepare_weights(w1, w2):
    """One-time (init) transform of the Conv1d weights into matmul layouts.

    w1: (32, C) fc1 weight with the size-1 kernel dim squeezed.
    w2: (C, 32) fc2 weight with the size-1 kernel dim squeezed.
    Returns (w1t, w2t) = ((C, 32), (32, C)); do this once at parameter init, not per call.
    """
    return jnp.transpose(w1), jnp.transpose(w2)


def _pick_block_b(B, C, L, itemsize):
    """Largest batch tile with ~2 MiB of x per block (so x+out double-buffered stays well
    under the v7x 64 MiB VMEM ceiling), that divides B and keeps the (bb, C) attention
    block sublane-aligned (bb == B or bb % 8 == 0)."""
    target_bytes = 2 * 1024 * 1024
    cap = max(1, min(B, target_bytes // max(1, C * L * itemsize)))
    for bb in range(cap, 0, -1):
        if B % bb == 0 and (bb == B or bb % 8 == 0):
            return bb
    return B  # fallback: whole batch resident in a single step


@partial(jax.jit, donate_argnums=(0,))
def channel_attention_forward(x, w1t, w2t):
    """x: (B, C, L); w1t: (C, 32) pre-transposed fc1; w2t: (32, C) pre-transposed fc2.

    x is donated: its HBM buffer is reused for `out` via input_output_aliases.
    Returns (out (B, C, L), attention (B, C, 1)) matching the PyTorch module.
    """
    B, C, L = x.shape
    H = w1t.shape[1]
    itemsize = jnp.dtype(x.dtype).itemsize

    bb = _pick_block_b(B, C, L, itemsize)
    grid_b = B // bb

    # Explicit VMEM budget: x/out blocks double-buffered + weights + attn, with 2x headroom.
    x_blk_bytes = bb * C * L * itemsize
    vmem_need = 4 * x_blk_bytes + 4 * (2 * C * H) * 4 + 2 * bb * C * itemsize
    vmem_limit = int(min(64 * 2 ** 20, max(4 * 2 ** 20, 2 * vmem_need)))

    cost = pl.CostEstimate(
        flops=2 * (2 * B) * C * H            # fc1 on (avg ++ max)
        + 2 * B * H * C                      # fc2 on summed hidden
        + 3 * B * C * L,                     # pooling + epilogue scale
        transcendentals=B * C,               # sigmoid
        bytes_accessed=itemsize * (2 * B * C * L + B * C) + 4 * 2 * C * H,
    )

    out, attn = pl.pallas_call(
        _channel_attention_kernel,
        out_shape=(
            jax.ShapeDtypeStruct((B, C, L), x.dtype),
            jax.ShapeDtypeStruct((B, C), x.dtype),
        ),
        grid=(grid_b,),
        in_specs=[
            pl.BlockSpec((bb, C, L), lambda i: (i, 0, 0)),
            pl.BlockSpec((C, H), lambda i: (0, 0)),
            pl.BlockSpec((H, C), lambda i: (0, 0)),
        ],
        out_specs=(
            pl.BlockSpec((bb, C, L), lambda i: (i, 0, 0)),
            pl.BlockSpec((bb, C), lambda i: (i, 0)),
        ),
        input_output_aliases={0: 0},   # out reuses x's HBM buffer (caller donates x)
        compiler_params=pltpu.CompilerParams(
            dimension_semantics=("parallel",),   # batch tiles are independent (v7x megacore)
            vmem_limit_bytes=vmem_limit,
        ),
        cost_estimate=cost,
    )(x, w1t, w2t)

    return out, attn.reshape(B, C, 1)   # match torch: attention has shape (B, C, 1)


if __name__ == "__main__":
    key = jax.random.PRNGKey(0)
    k_x, k_w1, k_w2 = jax.random.split(key, 3)

    # Small shapes implied by the module: batch=2, in_planes(channels)=64, seq=128, hidden=32.
    B, C, L, H = 2, 64, 128, 32
    x = jax.random.normal(k_x, (B, C, L), dtype=jnp.float32)
    # Conv1d(C, 32, 1, bias=False) / Conv1d(32, C, 1, bias=False) weights (kernel dim squeezed).
    bound1 = 1.0 / jnp.sqrt(jnp.float32(C))
    bound2 = 1.0 / jnp.sqrt(jnp.float32(H))
    w1 = jax.random.uniform(k_w1, (H, C), jnp.float32, -bound1, bound1)
    w2 = jax.random.uniform(k_w2, (C, H), jnp.float32, -bound2, bound2)

    # Pure-JAX reference (identical math to the torch module). Computed BEFORE the kernel
    # call because x is donated into the kernel (its buffer is reused for `out`).
    avg = jnp.mean(x, axis=-1, keepdims=True)                    # (B, C, 1)
    mx = jnp.max(x, axis=-1, keepdims=True)                      # (B, C, 1)

    def mlp(v):  # 1x1 convs == per-position matmuls over the channel dim
        h = jax.nn.relu(jnp.einsum('hc,bcl->bhl', w1, v))
        return jnp.einsum('ch,bhl->bcl', w2, h)

    ref_attn = jax.nn.sigmoid(mlp(avg) + mlp(mx))                # (B, C, 1)
    ref_out = x + ref_attn * x
    ref_attn, ref_out = jax.block_until_ready((ref_attn, ref_out))

    # One-time weight prep (transpose at init time, not per forward call).
    w1t, w2t = prepare_weights(w1, w2)

    out, attention = channel_attention_forward(x, w1t, w2t)
    out, attention = jax.block_until_ready((out, attention))

    assert out.shape == (B, C, L)
    assert attention.shape == (B, C, 1)
    assert jnp.allclose(attention, ref_attn, atol=1e-5, rtol=1e-5)
    assert jnp.allclose(out, ref_out, atol=1e-5, rtol=1e-5)

    print("KERNEL_OK")
</pallas_src>

<mosaic_0001>
module attributes {stable_mosaic.version = 11 : i64} {
  func.func @_channel_attention_kernel(%arg0: i32, %arg1: memref<2x64x128xf32, #tpu.memory_space<vmem>>, %arg2: memref<64x32xf32, #tpu.memory_space<vmem>>, %arg3: memref<32x64xf32, #tpu.memory_space<vmem>>, %arg4: memref<2x64x128xf32, #tpu.memory_space<vmem>>, %arg5: memref<2x64xf32, #tpu.memory_space<vmem>>) attributes {dimension_semantics = [#tpu.dimension_semantics<parallel>], iteration_bounds = array<i64: 1>, scalar_prefetch = 0 : i64, scratch_operands = 0 : i64, tpu.core_type = #tpu.core_type<tc>, window_params = [{transform_indices = @transform_0, window_bounds = array<i64: 2, 64, 128>}, {pipeline_mode = #tpu.pipeline_mode<synchronous>, transform_indices = @transform_1, window_bounds = array<i64: 64, 32>}, {pipeline_mode = #tpu.pipeline_mode<synchronous>, transform_indices = @transform_2, window_bounds = array<i64: 32, 64>}, {transform_indices = @transform_3, window_bounds = array<i64: 2, 64, 128>}, {transform_indices = @transform_4, window_bounds = array<i64: 2, 64>}]} {
    %c0 = arith.constant 0 : index
    %c0_0 = arith.constant 0 : index
    %c0_1 = arith.constant 0 : index
    %0 = vector.load %arg1[%c0, %c0_0, %c0_1] : memref<2x64x128xf32, #tpu.memory_space<vmem>>, vector<2x64x128xf32>
    %cst = arith.constant dense<0.000000e+00> : vector<2x64xf32>
    %1 = vector.multi_reduction <add>, %0, %cst [2] : vector<2x64x128xf32> to vector<2x64xf32>
    %cst_2 = arith.constant 7.812500e-03 : f32
    %2 = vector.broadcast %cst_2 : f32 to vector<2x64xf32>
    %3 = arith.mulf %1, %2 : vector<2x64xf32>
    %cst_3 = arith.constant dense<0xFF800000> : vector<2x64xf32>
    %4 = vector.multi_reduction <maximumf>, %0, %cst_3 [2] : vector<2x64x128xf32> to vector<2x64xf32>
    %5 = tpu.concatenate %3, %4 in 0 : vector<2x64xf32>, vector<2x64xf32> -> vector<4x64xf32>
    %c0_4 = arith.constant 0 : index
    %c0_5 = arith.constant 0 : index
    %6 = vector.load %arg2[%c0_4, %c0_5] : memref<64x32xf32, #tpu.memory_space<vmem>>, vector<64x32xf32>
    %cst_6 = arith.constant dense<0.000000e+00> : vector<4x32xf32>
    %7 = tpu.matmul %5, %6, %cst_6 {dimension_numbers = #tpu.dot_dimension_numbers<[1], [0], [0], [1], [0, 0, 1, 1], [], []>} : vector<4x64xf32>, vector<64x32xf32>, vector<4x32xf32> -> vector<4x32xf32>
    %cst_7 = arith.constant 0.000000e+00 : f32
    %8 = vector.broadcast %cst_7 : f32 to vector<4x32xf32>
    %9 = arith.maximumf %7, %8 : vector<4x32xf32>
    %10 = vector.extract_strided_slice %9 {offsets = [0, 0], sizes = [2, 32], strides = [1, 1]} : vector<4x32xf32> to vector<2x32xf32>
    %11 = vector.extract_strided_slice %9 {offsets = [2, 0], sizes = [2, 32], strides = [1, 1]} : vector<4x32xf32> to vector<2x32xf32>
    %12 = arith.addf %10, %11 : vector<2x32xf32>
    %c0_8 = arith.constant 0 : index
    %c0_9 = arith.constant 0 : index
    %13 = vector.load %arg3[%c0_8, %c0_9] : memref<32x64xf32, #tpu.memory_space<vmem>>, vector<32x64xf32>
    %cst_10 = arith.constant dense<0.000000e+00> : vector<2x64xf32>
    %14 = tpu.matmul %12, %13, %cst_10 {dimension_numbers = #tpu.dot_dimension_numbers<[1], [0], [0], [1], [0, 0, 1, 1], [], []>} : vector<2x32xf32>, vector<32x64xf32>, vector<2x64xf32> -> vector<2x64xf32>
    %15 = arith.negf %14 : vector<2x64xf32>
    %16 = math.exp %15 : vector<2x64xf32>
    %cst_11 = arith.constant 1.000000e+00 : f32
    %17 = vector.broadcast %cst_11 : f32 to vector<2x64xf32>
    %18 = arith.addf %17, %16 : vector<2x64xf32>
    %19 = arith.divf %17, %18 : vector<2x64xf32>
    %c0_12 = arith.constant 0 : index
    %c0_13 = arith.constant 0 : index
    %20 = vector.load %arg5[%c0_12, %c0_13] : memref<2x64xf32, #tpu.memory_space<vmem>>, vector<2x64xf32>
    tpu.vector_store %arg5[%c0_12, %c0_13], %19 {strides = array<i32>} : memref<2x64xf32, #tpu.memory_space<vmem>>, vector<2x64xf32>,
    %cst_14 = arith.constant 1.000000e+00 : f32
    %21 = vector.broadcast %cst_14 : f32 to vector<2x64xf32>
    %22 = arith.addf %21, %19 : vector<2x64xf32>
    %23 = vector.shape_cast %22 : vector<2x64xf32> to vector<2x64x1xf32>
    %24 = vector.broadcast %23 : vector<2x64x1xf32> to vector<2x64x128xf32>
    %25 = arith.mulf %0, %24 : vector<2x64x128xf32>
    %c0_15 = arith.constant 0 : index
    %c0_16 = arith.constant 0 : index
    %c0_17 = arith.constant 0 : index
    %26 = vector.load %arg4[%c0_15, %c0_16, %c0_17] : memref<2x64x128xf32, #tpu.memory_space<vmem>>, vector<2x64x128xf32>
    tpu.vector_store %arg4[%c0_15, %c0_16, %c0_17], %25 {strides = array<i32>} : memref<2x64x128xf32, #tpu.memory_space<vmem>>, vector<2x64x128xf32>,
    return
  }
  func.func @transform_0(%arg0: i32) -> (i32, i32, i32) {
    %c0_i32 = arith.constant 0 : i32
    %c0_i32_0 = arith.constant 0 : i32
    %c0_i32_1 = arith.constant 0 : i32
    return %arg0, %c0_i32, %c0_i32_0 : i32, i32, i32
  }
  func.func @transform_1(%arg0: i32) -> (i32, i32) {
    %c0_i32 = arith.constant 0 : i32
    %c0_i32_0 = arith.constant 0 : i32
    %c0_i32_1 = arith.constant 0 : i32
    return %c0_i32, %c0_i32_0 : i32, i32
  }
  func.func @transform_2(%arg0: i32) -> (i32, i32) {
    %c0_i32 = arith.constant 0 : i32
    %c0_i32_0 = arith.constant 0 : i32
    %c0_i32_1 = arith.constant 0 : i32
    return %c0_i32, %c0_i32_0 : i32, i32
  }
  func.func @transform_3(%arg0: i32) -> (i32, i32, i32) {
    %c0_i32 = arith.constant 0 : i32
    %c0_i32_0 = arith.constant 0 : i32
    %c0_i32_1 = arith.constant 0 : i32
    return %arg0, %c0_i32, %c0_i32_0 : i32, i32, i32
  }
  func.func @transform_4(%arg0: i32) -> (i32, i32) {
    %c0_i32 = arith.constant 0 : i32
    %c0_i32_0 = arith.constant 0 : i32
    return %arg0, %c0_i32 : i32, i32
  }
}

</mosaic_0001>

<llo_original>
// kernel: channel_attention_forward.1
$region0: #{channel_attention_forward.1}
  #allocation0 [shape = 'u32[]', space=smem, size = 0x4, offset = 0x4, fixed_abs, tag = 'smem constant byte address 0x4 - core index']
  #allocation1 [shape = 'u32[144,128]{1,0:T(1,128)}', space=vmem, size = 0x12000, scoped, tag = 'internal scratch']
  %s0 = inlined_call_operand.hbm [shape: f32[2,64,128], index: 0, kind: input, shape index: {}, may-alias: {0,3}]
  %s1 = inlined_call_operand.vmem [shape: f32[64,32], index: 1, kind: input, shape index: {}]
  %s2 = inlined_call_operand.vmem [shape: f32[32,64], index: 2, kind: input, shape index: {}]
  %s3 = inlined_call_operand.hbm [shape: f32[2,64,128], index: 3, kind: output, shape index: {0}, may-alias: {0,3}]
  %s4 = inlined_call_operand.hbm [shape: f32[2,64], index: 4, kind: output, shape index: {1}]
  %5 = xla_tuple %s3, %s4
  %s6 = sld [smem:[#allocation0]]
  $region34: #{channel_attention_forward.1} parent=0
    _
  %s8 = ssub.s32 1, %s6
  %s9 = scalar_select 0, %s8, %s6
  $region1: #{channel_attention_forward.1} parent=0
    #allocation2 [shape = 'u8[65536]{0}', space=vmem, size = 0x10000, scoped, tag = 'input window, operand 0, single buffered']
    #allocation3 [shape = 's32[1]{0}', space=sflag, size = 0x4, scoped, tag = 'scoped memory for channel_attention_forward.1']
    #allocation4 [shape = 's32[1]{0}', space=sflag, size = 0x4, scoped, tag = 'scoped memory for channel_attention_forward.1']
    #allocation5 [shape = 'u8[65536]{0}', space=vmem, size = 0x10000, scoped, tag = 'output window, operand 0, single buffered']
    #allocation6 [shape = 'u8[1024]{0}', space=vmem, size = 0x400, scoped, tag = 'output window, operand 1, single buffered']
    #allocation7 [shape = 's32[1]{0}', space=sflag, size = 0x4, scoped, tag = 'scoped memory for channel_attention_forward.1']
    %10 = vsyncpa [#allocation3], 0
    %11 = vsyncpa [#allocation4], 0
    %12 = vsyncpa [#allocation7], 0
    // Predicated region
    $region2: #{channel_attention_forward.1} parent=1 // pred_check
      _
    $region3: #{channel_attention_forward.1} parent=1 // pred_check_branch
      %14 = sbr.rel (0) target = $region5
    $region4: #{channel_attention_forward.1} parent=1 // pred_region
      %s16 = ssub.s32 2048, 2048
      %17 = vsyncadd [#allocation3], %s16
      %s18 = sshll.u32 [#allocation2], 4
      %s19 = int_to_ptr.vmem [resolvable:$true] %s18
      %24 = dma.hbm_to_vmem [thread:$0]  %s0, 2048, %s19, [#allocation3], 128, 128, 8
    $region5: #{channel_attention_forward.1} parent=1 // pred_fallthru
      _
    // Predicated region
    $region6: #{channel_attention_forward.1} parent=1 // pred_check
      _
    $region7: #{channel_attention_forward.1} parent=1 // pred_check_branch
      %26 = sbr.rel (0) target = $region9
    $region8: #{channel_attention_forward.1} parent=1 // pred_region
      _
    $region9: #{channel_attention_forward.1} parent=1 // pred_fallthru
      _
    // Predicated region
    $region10: #{channel_attention_forward.1} parent=1 // pred_check
      _
    $region11: #{channel_attention_forward.1} parent=1 // pred_check_branch
      %28 = sbr.rel (0) target = $region13
    $region12: #{channel_attention_forward.1} parent=1 // pred_region
      _
    $region13: #{channel_attention_forward.1} parent=1 // pred_fallthru
      _
    // Predicated region
    $region14: #{channel_attention_forward.1} parent=1 // pred_check
      _
    $region15: #{channel_attention_forward.1} parent=1 // pred_check_branch
      %30 = sbr.rel (0) target = $region17
    $region16: #{channel_attention_forward.1} parent=1 // pred_region
      %31 = dma.done [#allocation3], 2048
    $region17: #{channel_attention_forward.1} parent=1 // pred_fallthru
      _
    %v32 = vld [vmem:[#allocation2] sm:$0xff]
    %v33 = vld [vmem:[#allocation2 + $0x8] sm:$0xff]
    %v34 = vld [vmem:[#allocation2 + $0x10] sm:$0xff]
    %v35 = vld [vmem:[#allocation2 + $0x18] sm:$0xff]
    %v36 = vld [vmem:[#allocation2 + $0x20] sm:$0xff]
    %v37 = vld [vmem:[#allocation2 + $0x28] sm:$0xff]
    %v38 = vld [vmem:[#allocation2 + $0x30] sm:$0xff]
    %v39 = vld [vmem:[#allocation2 + $0x38] sm:$0xff]
    %v40 = vld [vmem:[#allocation2 + $0x40] sm:$0xff]
    %v41 = vld [vmem:[#allocation2 + $0x48] sm:$0xff]
    %v42 = vld [vmem:[#allocation2 + $0x50] sm:$0xff]
    %v43 = vld [vmem:[#allocation2 + $0x58] sm:$0xff]
    %v44 = vld [vmem:[#allocation2 + $0x60] sm:$0xff]
    %v45 = vld [vmem:[#allocation2 + $0x68] sm:$0xff]
    %v46 = vld [vmem:[#allocation2 + $0x70] sm:$0xff]
    %v47 = vld [vmem:[#allocation2 + $0x78] sm:$0xff]
    %48 = vadd.xlane.f32.xlu0 %v32
    %v49 = vpop.xlane.xlu0 %48
    %50 = vadd.xlane.f32.xlu0 %v33
    %v51 = vpop.xlane.xlu0 %50
    %52 = vadd.xlane.f32.xlu0 %v34
    %v53 = vpop.xlane.xlu0 %52
    %54 = vadd.xlane.f32.xlu0 %v35
    %v55 = vpop.xlane.xlu0 %54
    %56 = vadd.xlane.f32.xlu0 %v36
    %v57 = vpop.xlane.xlu0 %56
    %58 = vadd.xlane.f32.xlu0 %v37
    %v59 = vpop.xlane.xlu0 %58
    %60 = vadd.xlane.f32.xlu0 %v38
    %v61 = vpop.xlane.xlu0 %60
    %62 = vadd.xlane.f32.xlu0 %v39
    %v63 = vpop.xlane.xlu0 %62
    %64 = vadd.xlane.f32.xlu0 %v40
    %v65 = vpop.xlane.xlu0 %64
    %66 = vadd.xlane.f32.xlu0 %v41
    %v67 = vpop.xlane.xlu0 %66
    %68 = vadd.xlane.f32.xlu0 %v42
    %v69 = vpop.xlane.xlu0 %68
    %70 = vadd.xlane.f32.xlu0 %v43
    %v71 = vpop.xlane.xlu0 %70
    %72 = vadd.xlane.f32.xlu0 %v44
    %v73 = vpop.xlane.xlu0 %72
    %74 = vadd.xlane.f32.xlu0 %v45
    %v75 = vpop.xlane.xlu0 %74
    %76 = vadd.xlane.f32.xlu0 %v46
    %v77 = vpop.xlane.xlu0 %76
    %78 = vadd.xlane.f32.xlu0 %v47
    %v79 = vpop.xlane.xlu0 %78
    %v80 = vmul.f32 %v49, 0.0078125
    %v81 = vmul.f32 %v51, 0.0078125
    %v82 = vmul.f32 %v53, 0.0078125
    %v83 = vmul.f32 %v55, 0.0078125
    %v84 = vmul.f32 %v57, 0.0078125
    %v85 = vmul.f32 %v59, 0.0078125
    %v86 = vmul.f32 %v61, 0.0078125
    %v87 = vmul.f32 %v63, 0.0078125
    %v88 = vmul.f32 %v65, 0.0078125
    %v89 = vmul.f32 %v67, 0.0078125
    %v90 = vmul.f32 %v69, 0.0078125
    %v91 = vmul.f32 %v71, 0.0078125
    %v92 = vmul.f32 %v73, 0.0078125
    %v93 = vmul.f32 %v75, 0.0078125
    %v94 = vmul.f32 %v77, 0.0078125
    %v95 = vmul.f32 %v79, 0.0078125
    %96 = vmax.xlane.f32.xlu0 %v32
    %v97 = vpop.xlane.xlu0 %96
    %98 = vmax.xlane.f32.xlu0 %v33
    %v99 = vpop.xlane.xlu0 %98
    %100 = vmax.xlane.f32.xlu0 %v34
    %v101 = vpop.xlane.xlu0 %100
    %102 = vmax.xlane.f32.xlu0 %v35
    %v103 = vpop.xlane.xlu0 %102
    %104 = vmax.xlane.f32.xlu0 %v36
    %v105 = vpop.xlane.xlu0 %104
    %106 = vmax.xlane.f32.xlu0 %v37
    %v107 = vpop.xlane.xlu0 %106
    %108 = vmax.xlane.f32.xlu0 %v38
    %v109 = vpop.xlane.xlu0 %108
    %110 = vmax.xlane.f32.xlu0 %v39
    %v111 = vpop.xlane.xlu0 %110
    %112 = vmax.xlane.f32.xlu0 %v40
    %v113 = vpop.xlane.xlu0 %112
    %114 = vmax.xlane.f32.xlu0 %v41
    %v115 = vpop.xlane.xlu0 %114
    %116 = vmax.xlane.f32.xlu0 %v42
    %v117 = vpop.xlane.xlu0 %116
    %118 = vmax.xlane.f32.xlu0 %v43
    %v119 = vpop.xlane.xlu0 %118
    %120 = vmax.xlane.f32.xlu0 %v44
    %v121 = vpop.xlane.xlu0 %120
    %122 = vmax.xlane.f32.xlu0 %v45
    %v123 = vpop.xlane.xlu0 %122
    %124 = vmax.xlane.f32.xlu0 %v46
    %v125 = vpop.xlane.xlu0 %124
    %126 = vmax.xlane.f32.xlu0 %v47
    %v127 = vpop.xlane.xlu0 %126
    %v144 = vlaneseq
    %v145 = vand.u32 %v144, 127
    %v146 = vlaneseq
    %v147 = vshrl.u32 %v146, 7
    %v148 = vsub.s32 %v145, %v147
    %v149 = vrot.slane %v80, %v148
    %v150 = vadd.s32 %v145, 4294967288
    %v151 = vlaneseq
    %v152 = vshrl.u32 %v151, 7
    %v153 = vsub.s32 %v150, %v152
    %v154 = vrot.slane %v81, %v153
    %vm155 = vcmask 130112
    %v156 = vsel %vm155, %v154, %v149
    %v157 = vadd.s32 %v145, 4294967280
    %v158 = vlaneseq
    %v159 = vshrl.u32 %v158, 7
    %v160 = vsub.s32 %v157, %v159
    %v161 = vrot.slane %v82, %v160
    %vm162 = vcmask 195712
    %v163 = vsel %vm162, %v161, %v156
    %v164 = vadd.s32 %v145, 4294967272
    %v165 = vlaneseq
    %v166 = vshrl.u32 %v165, 7
    %v167 = vsub.s32 %v164, %v166
    %v168 = vrot.slane %v83, %v167
    %vm169 = vcmask 261312
    %v170 = vsel %vm169, %v168, %v163
    %v171 = vadd.s32 %v145, 4294967264
    %v172 = vlaneseq
    %v173 = vshrl.u32 %v172, 7
    %v174 = vsub.s32 %v171, %v173
    %v175 = vrot.slane %v84, %v174
    %vm176 = vcmask 326912
    %v177 = vsel %vm176, %v175, %v170
    %v178 = vadd.s32 %v145, 4294967256
    %v179 = vlaneseq
    %v180 = vshrl.u32 %v179, 7
    %v181 = vsub.s32 %v178, %v180
    %v182 = vrot.slane %v85, %v181
    %vm183 = vcmask 392512
    %v184 = vsel %vm183, %v182, %v177
    %v185 = vadd.s32 %v145, 4294967248
    %v186 = vlaneseq
    %v187 = vshrl.u32 %v186, 7
    %v188 = vsub.s32 %v185, %v187
    %v189 = vrot.slane %v86, %v188
    %vm190 = vcmask 458112
    %v191 = vsel %vm190, %v189, %v184
    %v192 = vadd.s32 %v145, 4294967240
    %v193 = vlaneseq
    %v194 = vshrl.u32 %v193, 7
    %v195 = vsub.s32 %v192, %v194
    %v196 = vrot.slane %v87, %v195
    %vm197 = vcmask 523712
    %v198 = vsel %vm197, %v196, %v191
    %v199 = vlaneseq
    %v200 = vshrl.u32 %v199, 7
    %v201 = vsub.s32 %v145, %v200
    %v202 = vrot.slane %v88, %v201
    %v203 = vlaneseq
    %v204 = vshrl.u32 %v203, 7
    %v205 = vsub.s32 %v150, %v204
    %v206 = vrot.slane %v89, %v205
    %v207 = vsel %vm155, %v206, %v202
    %v208 = vlaneseq
    %v209 = vshrl.u32 %v208, 7
    %v210 = vsub.s32 %v157, %v209
    %v211 = vrot.slane %v90, %v210
    %v212 = vsel %vm162, %v211, %v207
    %v213 = vlaneseq
    %v214 = vshrl.u32 %v213, 7
    %v215 = vsub.s32 %v164, %v214
    %v216 = vrot.slane %v91, %v215
    %v217 = vsel %vm169, %v216, %v212
    %v218 = vlaneseq
    %v219 = vshrl.u32 %v218, 7
    %v220 = vsub.s32 %v171, %v219
    %v221 = vrot.slane %v92, %v220
    %v222 = vsel %vm176, %v221, %v217
    %v223 = vlaneseq
    %v224 = vshrl.u32 %v223, 7
    %v225 = vsub.s32 %v178, %v224
    %v226 = vrot.slane %v93, %v225
    %v227 = vsel %vm183, %v226, %v222
    %v228 = vlaneseq
    %v229 = vshrl.u32 %v228, 7
    %v230 = vsub.s32 %v185, %v229
    %v231 = vrot.slane %v94, %v230
    %v232 = vsel %vm190, %v231, %v227
    %v233 = vlaneseq
    %v234 = vshrl.u32 %v233, 7
    %v235 = vsub.s32 %v192, %v234
    %v236 = vrot.slane %v95, %v235
    %v237 = vsel %vm197, %v236, %v232
    %vm238 = vcmask 1041409
    %v239 = vsel %vm238, %v237, %v198
    %v257 = vlaneseq
    %v258 = vshrl.u32 %v257, 7
    %v259 = vsub.s32 %v145, %v258
    %v260 = vrot.slane %v97, %v259
    %v261 = vlaneseq
    %v262 = vshrl.u32 %v261, 7
    %v263 = vsub.s32 %v150, %v262
    %v264 = vrot.slane %v99, %v263
    %v265 = vsel %vm155, %v264, %v260
    %v266 = vlaneseq
    %v267 = vshrl.u32 %v266, 7
    %v268 = vsub.s32 %v157, %v267
    %v269 = vrot.slane %v101, %v268
    %v270 = vsel %vm162, %v269, %v265
    %v271 = vlaneseq
    %v272 = vshrl.u32 %v271, 7
    %v273 = vsub.s32 %v164, %v272
    %v274 = vrot.slane %v103, %v273
    %v275 = vsel %vm169, %v274, %v270
    %v276 = vlaneseq
    %v277 = vshrl.u32 %v276, 7
    %v278 = vsub.s32 %v171, %v277
    %v279 = vrot.slane %v105, %v278
    %v280 = vsel %vm176, %v279, %v275
    %v281 = vlaneseq
    %v282 = vshrl.u32 %v281, 7
    %v283 = vsub.s32 %v178, %v282
    %v284 = vrot.slane %v107, %v283
    %v285 = vsel %vm183, %v284, %v280
    %v286 = vlaneseq
    %v287 = vshrl.u32 %v286, 7
    %v288 = vsub.s32 %v185, %v287
    %v289 = vrot.slane %v109, %v288
    %v290 = vsel %vm190, %v289, %v285
    %v291 = vlaneseq
    %v292 = vshrl.u32 %v291, 7
    %v293 = vsub.s32 %v192, %v292
    %v294 = vrot.slane %v111, %v293
    %v295 = vsel %vm197, %v294, %v290
    %v296 = vlaneseq
    %v297 = vshrl.u32 %v296, 7
    %v298 = vsub.s32 %v145, %v297
    %v299 = vrot.slane %v113, %v298
    %v300 = vlaneseq
    %v301 = vshrl.u32 %v300, 7
    %v302 = vsub.s32 %v150, %v301
    %v303 = vrot.slane %v115, %v302
    %v304 = vsel %vm155, %v303, %v299
    %v305 = vlaneseq
    %v306 = vshrl.u32 %v305, 7
    %v307 = vsub.s32 %v157, %v306
    %v308 = vrot.slane %v117, %v307
    %v309 = vsel %vm162, %v308, %v304
    %v310 = vlaneseq
    %v311 = vshrl.u32 %v310, 7
    %v312 = vsub.s32 %v164, %v311
    %v313 = vrot.slane %v119, %v312
    %v314 = vsel %vm169, %v313, %v309
    %v315 = vlaneseq
    %v316 = vshrl.u32 %v315, 7
    %v317 = vsub.s32 %v171, %v316
    %v318 = vrot.slane %v121, %v317
    %v319 = vsel %vm176, %v318, %v314
    %v320 = vlaneseq
    %v321 = vshrl.u32 %v320, 7
    %v322 = vsub.s32 %v178, %v321
    %v323 = vrot.slane %v123, %v322
    %v324 = vsel %vm183, %v323, %v319
    %v325 = vlaneseq
    %v326 = vshrl.u32 %v325, 7
    %v327 = vsub.s32 %v185, %v326
    %v328 = vrot.slane %v125, %v327
    %v329 = vsel %vm190, %v328, %v324
    %v330 = vlaneseq
    %v331 = vshrl.u32 %v330, 7
    %v332 = vsub.s32 %v192, %v331
    %v333 = vrot.slane %v127, %v332
    %v334 = vsel %vm197, %v333, %v329
    %vm335 = vcmask 1043459
    %v336 = vsel %vm335, %v334, %v295
    %vm338 = vcmask 1041408
    %v339 = vsel %vm338, %v239, %v336
    %v340 = vld [vmem:[%s1] sm:$0xff]
    %v341 = vld [vmem:[%s1 + $0x8] sm:$0xff]
    %v342 = vld [vmem:[%s1 + $0x10] sm:$0xff]
    %v343 = vld [vmem:[%s1 + $0x18] sm:$0xff]
    %v344 = vld [vmem:[%s1 + $0x20] sm:$0xff]
    %v345 = vld [vmem:[%s1 + $0x28] sm:$0xff]
    %v346 = vld [vmem:[%s1 + $0x30] sm:$0xff]
    %v347 = vld [vmem:[%s1 + $0x38] sm:$0xff]
    %vm348 = vcmask 523264
    %v350 = vsel %vm348, %v339, 0
    %352 = vmatprep.subr.mxu0 0.0
    %353 = vmatpush1.msra.mxu0 %v340
    %354 = vmatprep.subr.mxu0 0.0
    %355 = vmatpush1.msra.mxu0 %v341
    %356 = vmatprep.subr.mxu0 0.0
    %357 = vmatpush1.msra.mxu0 %v342
    %358 = vmatprep.subr.mxu0 0.0
    %359 = vmatpush1.msra.mxu0 %v343
    %360 = vmatprep.subr.mxu0 0.0
    %361 = vmatpush1.msra.mxu0 %v344
    %362 = vmatprep.subr.mxu0 0.0
    %363 = vmatpush1.msra.mxu0 %v345
    %364 = vmatprep.subr.mxu0 0.0
    %365 = vmatpush1.msra.mxu0 %v346
    %366 = vmatprep.subr.mxu0 0.0
    %367 = vmatpush1.msra.mxu0 %v347
    %368 = vmatprep.subr.mxu0 0.0
    %369 = vmatpush1.msra.mxu0 0.0
    %370 = vmatprep.subr.mxu0 0.0
    %371 = vmatpush1.msra.mxu0 0.0
    %372 = vmatprep.subr.mxu0 0.0
    %373 = vmatpush1.msra.mxu0 0.0
    %374 = vmatprep.subr.mxu0 0.0
    %375 = vmatpush1.msra.mxu0 0.0
    %376 = vmatprep.subr.mxu0 0.0
    %377 = vmatpush1.msra.mxu0 0.0
    %378 = vmatprep.subr.mxu0 0.0
    %379 = vmatpush1.msra.mxu0 0.0
    %380 = vmatprep.subr.mxu0 0.0
    %381 = vmatpush1.msra.mxu0 0.0
    %382 = vmatprep.subr.mxu0 0.0
    %383 = vmatpush1.msra.mxu0 0.0
    %384 = vmatprep.subr.mxu0 0.0
    %385 = vmatpush1.msra.mxu0 0.0
    %386 = vmatprep.subr.mxu0 0.0
    %387 = vmatpush1.msra.mxu0 0.0
    %388 = vmatprep.subr.mxu0 0.0
    %389 = vmatpush1.msra.mxu0 0.0
    %390 = vmatprep.subr.mxu0 0.0
    %391 = vmatpush1.msra.mxu0 0.0
    %392 = vmatprep.subr.mxu0 0.0
    %393 = vmatpush1.msra.mxu0 0.0
    %394 = vmatprep.subr.mxu0 0.0
    %395 = vmatpush1.msra.mxu0 0.0
    %396 = vmatprep.subr.mxu0 0.0
    %397 = vmatpush1.msra.mxu0 0.0
    %398 = vmatprep.subr.mxu0 0.0
    %399 = vmatpush1.msra.mxu0 0.0
    %400 = vmatprep.subr.mxu0 0.0
    %401 = vmatpush1.msra.mxu0 0.0
    %402 = vmatprep.subr.mxu0 0.0
    %403 = vmatpush1.msra.mxu0 0.0
    %404 = vmatprep.subr.mxu0 0.0
    %405 = vmatpush1.msra.mxu0 0.0
    %406 = vmatprep.subr.mxu0 0.0
    %407 = vmatpush1.msra.mxu0 0.0
    %408 = vmatprep.subr.mxu0 0.0
    %409 = vmatpush1.msra.mxu0 0.0
    %410 = vmatprep.subr.mxu0 0.0
    %411 = vmatpush1.msra.mxu0 0.0
    %412 = vmatprep.subr.mxu0 0.0
    %413 = vmatpush1.msra.mxu0 0.0
    %414 = vmatprep.subr.mxu0 0.0
    %415 = vmatpush1.msra.mxu0 0.0
    %416 = vmatprep.mubr.f32.mxu0 0.0
    %417 = vmatmul.mubr.f32.gmra.mrb[0].mxu0 %v350
    %v418 = vpop.f32.mrb[0].mxu0
    %v419 = vadd.f32 0.0, %v418
    %v420 = vpop.f32.mrb[0].mxu0
    %421 = vdwg.mxu0
    %v422 = vmax.f32 %v419, 0.0
    %v424 = vrot.slane %v422, 2
    %v426 = vadd.f32 %v422, %v424
    %v427 = vld [vmem:[%s2] sm:$0xff]
    %v428 = vld [vmem:[%s2 + $0x8] sm:$0xff]
    %v429 = vld [vmem:[%s2 + $0x10] sm:$0xff]
    %v430 = vld [vmem:[%s2 + $0x18] sm:$0xff]
    %vm431 = vcmask 261120
    %v433 = vsel %vm431, %v426, 0
    %435 = vmatprep.subr.mxu0 0.0
    %436 = vmatpush1.msra.mxu0 %v427
    %437 = vmatprep.subr.mxu0 0.0
    %438 = vmatpush1.msra.mxu0 %v428
    %439 = vmatprep.subr.mxu0 0.0
    %440 = vmatpush1.msra.mxu0 %v429
    %441 = vmatprep.subr.mxu0 0.0
    %442 = vmatpush1.msra.mxu0 %v430
    %443 = vmatprep.subr.mxu0 0.0
    %444 = vmatpush1.msra.mxu0 0.0
    %445 = vmatprep.subr.mxu0 0.0
    %446 = vmatpush1.msra.mxu0 0.0
    %447 = vmatprep.subr.mxu0 0.0
    %448 = vmatpush1.msra.mxu0 0.0
    %449 = vmatprep.subr.mxu0 0.0
    %450 = vmatpush1.msra.mxu0 0.0
    %451 = vmatprep.subr.mxu0 0.0
    %452 = vmatpush1.msra.mxu0 0.0
    %453 = vmatprep.subr.mxu0 0.0
    %454 = vmatpush1.msra.mxu0 0.0
    %455 = vmatprep.subr.mxu0 0.0
    %456 = vmatpush1.msra.mxu0 0.0
    %457 = vmatprep.subr.mxu0 0.0
    %458 = vmatpush1.msra.mxu0 0.0
    %459 = vmatprep.subr.mxu0 0.0
    %460 = vmatpush1.msra.mxu0 0.0
    %461 = vmatprep.subr.mxu0 0.0
    %462 = vmatpush1.msra.mxu0 0.0
    %463 = vmatprep.subr.mxu0 0.0
    %464 = vmatpush1.msra.mxu0 0.0
    %465 = vmatprep.subr.mxu0 0.0
    %466 = vmatpush1.msra.mxu0 0.0
    %467 = vmatprep.subr.mxu0 0.0
    %468 = vmatpush1.msra.mxu0 0.0
    %469 = vmatprep.subr.mxu0 0.0
    %470 = vmatpush1.msra.mxu0 0.0
    %471 = vmatprep.subr.mxu0 0.0
    %472 = vmatpush1.msra.mxu0 0.0
    %473 = vmatprep.subr.mxu0 0.0
    %474 = vmatpush1.msra.mxu0 0.0
    %475 = vmatprep.subr.mxu0 0.0
    %476 = vmatpush1.msra.mxu0 0.0
    %477 = vmatprep.subr.mxu0 0.0
    %478 = vmatpush1.msra.mxu0 0.0
    %479 = vmatprep.subr.mxu0 0.0
    %480 = vmatpush1.msra.mxu0 0.0
    %481 = vmatprep.subr.mxu0 0.0
    %482 = vmatpush1.msra.mxu0 0.0
    %483 = vmatprep.subr.mxu0 0.0
    %484 = vmatpush1.msra.mxu0 0.0
    %485 = vmatprep.subr.mxu0 0.0
    %486 = vmatpush1.msra.mxu0 0.0
    %487 = vmatprep.subr.mxu0 0.0
    %488 = vmatpush1.msra.mxu0 0.0
    %489 = vmatprep.subr.mxu0 0.0
    %490 = vmatpush1.msra.mxu0 0.0
    %491 = vmatprep.subr.mxu0 0.0
    %492 = vmatpush1.msra.mxu0 0.0
    %493 = vmatprep.subr.mxu0 0.0
    %494 = vmatpush1.msra.mxu0 0.0
    %495 = vmatprep.subr.mxu0 0.0
    %496 = vmatpush1.msra.mxu0 0.0
    %497 = vmatprep.subr.mxu0 0.0
    %498 = vmatpush1.msra.mxu0 0.0
    %499 = vmatprep.mubr.f32.mxu0 0.0
    %500 = vmatmul.mubr.f32.gmra.mrb[0].mxu0 %v433
    %v501 = vpop.f32.mrb[0].mxu0
    %v502 = vadd.f32 0.0, %v501
    %v503 = vpop.f32.mrb[0].mxu0
    %504 = vdwg.mxu0
    %v505 = vxor.u32 %v502, 2147483648
    %v506 = vmul.f32 %v505, 1.442695
    %v507 = vpow.pop %v506
    %v508 = vadd.f32 %v507, 1.0
    %v509 = vrcp.pop %v508
    %v510 = vmul.f32 1.0, %v509
    %vm511 = vcmask 517120
    %512 = vst.msk [vmem:[#allocation6] sm:$0x3] %vm511, %v510
    %v513 = vadd.f32 %v510, 1.0
    %v514 = vlaneseq
    %v515 = vshrl.u32 %v514, 7
    %v516 = vsub.s32 0, %v515
    %v517 = vrot.slane %v513, %v516
    %519 = vbcast.lane.b32.xlu0 %v517, 256
    %v520 = vpop.permute.xlu0 %519
    %s522 = sor.u32 256, 8
    %523 = vbcast.lane.b32.xlu0 %v517, %s522
    %v524 = vpop.permute.xlu0 %523
    %s526 = sor.u32 256, 16
    %527 = vbcast.lane.b32.xlu0 %v517, %s526
    %v528 = vpop.permute.xlu0 %527
    %s530 = sor.u32 256, 24
    %531 = vbcast.lane.b32.xlu0 %v517, %s530
    %v532 = vpop.permute.xlu0 %531
    %s534 = sor.u32 256, 32
    %535 = vbcast.lane.b32.xlu0 %v517, %s534
    %v536 = vpop.permute.xlu0 %535
    %s538 = sor.u32 256, 40
    %539 = vbcast.lane.b32.xlu0 %v517, %s538
    %v540 = vpop.permute.xlu0 %539
    %s542 = sor.u32 256, 48
    %543 = vbcast.lane.b32.xlu0 %v517, %s542
    %v544 = vpop.permute.xlu0 %543
    %s546 = sor.u32 256, 56
    %547 = vbcast.lane.b32.xlu0 %v517, %s546
    %v548 = vpop.permute.xlu0 %547
    %v549 = vlaneseq
    %v550 = vshrl.u32 %v549, 7
    %v551 = vsub.s32 1, %v550
    %v552 = vrot.slane %v513, %v551
    %554 = vbcast.lane.b32.xlu0 %v552, 256
    %v555 = vpop.permute.xlu0 %554
    %s557 = sor.u32 256, 8
    %558 = vbcast.lane.b32.xlu0 %v552, %s557
    %v559 = vpop.permute.xlu0 %558
    %s561 = sor.u32 256, 16
    %562 = vbcast.lane.b32.xlu0 %v552, %s561
    %v563 = vpop.permute.xlu0 %562
    %s565 = sor.u32 256, 24
    %566 = vbcast.lane.b32.xlu0 %v552, %s565
    %v567 = vpop.permute.xlu0 %566
    %s569 = sor.u32 256, 32
    %570 = vbcast.lane.b32.xlu0 %v552, %s569
    %v571 = vpop.permute.xlu0 %570
    %s573 = sor.u32 256, 40
    %574 = vbcast.lane.b32.xlu0 %v552, %s573
    %v575 = vpop.permute.xlu0 %574
    %s577 = sor.u32 256, 48
    %578 = vbcast.lane.b32.xlu0 %v552, %s577
    %v579 = vpop.permute.xlu0 %578
    %s581 = sor.u32 256, 56
    %582 = vbcast.lane.b32.xlu0 %v552, %s581
    %v583 = vpop.permute.xlu0 %582
    %v584 = vmul.f32 %v32, %v520
    %v585 = vmul.f32 %v33, %v524
    %v586 = vmul.f32 %v34, %v528
    %v587 = vmul.f32 %v35, %v532
    %v588 = vmul.f32 %v36, %v536
    %v589 = vmul.f32 %v37, %v540
    %v590 = vmul.f32 %v38, %v544
    %v591 = vmul.f32 %v39, %v548
    %v592 = vmul.f32 %v40, %v555
    %v593 = vmul.f32 %v41, %v559
    %v594 = vmul.f32 %v42, %v563
    %v595 = vmul.f32 %v43, %v567
    %v596 = vmul.f32 %v44, %v571
    %v597 = vmul.f32 %v45, %v575
    %v598 = vmul.f32 %v46, %v579
    %v599 = vmul.f32 %v47, %v583
    %600 = vst [vmem:[#allocation5] sm:$0xff] %v584
    %601 = vst [vmem:[#allocation5 + $0x8] sm:$0xff] %v585
    %602 = vst [vmem:[#allocation5 + $0x10] sm:$0xff] %v586
    %603 = vst [vmem:[#allocation5 + $0x18] sm:$0xff] %v587
    %604 = vst [vmem:[#allocation5 + $0x20] sm:$0xff] %v588
    %605 = vst [vmem:[#allocation5 + $0x28] sm:$0xff] %v589
    %606 = vst [vmem:[#allocation5 + $0x30] sm:$0xff] %v590
    %607 = vst [vmem:[#allocation5 + $0x38] sm:$0xff] %v591
    %608 = vst [vmem:[#allocation5 + $0x40] sm:$0xff] %v592
    %609 = vst [vmem:[#allocation5 + $0x48] sm:$0xff] %v593
    %610 = vst [vmem:[#allocation5 + $0x50] sm:$0xff] %v594
    %611 = vst [vmem:[#allocation5 + $0x58] sm:$0xff] %v595
    %612 = vst [vmem:[#allocation5 + $0x60] sm:$0xff] %v596
    %613 = vst [vmem:[#allocation5 + $0x68] sm:$0xff] %v597
    %614 = vst [vmem:[#allocation5 + $0x70] sm:$0xff] %v598
    %615 = vst [vmem:[#allocation5 + $0x78] sm:$0xff] %v599
    // Predicated region
    $region18: #{channel_attention_forward.1} parent=1 // pred_check
      _
    $region19: #{channel_attention_forward.1} parent=1 // pred_check_branch
      %617 = sbr.rel (0) target = $region21
    $region20: #{channel_attention_forward.1} parent=1 // pred_region
      %s619 = ssub.s32 2048, 2048
      %620 = vsyncadd [#allocation4], %s619
      %s621 = sshll.u32 [#allocation5], 4
      %s622 = int_to_ptr.vmem [resolvable:$true] %s621
      %627 = dma.vmem_to_hbm [thread:$0]  %s622, 2048, %s3, [#allocation4], 128, 128, 8
    $region21: #{channel_attention_forward.1} parent=1 // pred_fallthru
      _
    // Predicated region
    $region22: #{channel_attention_forward.1} parent=1 // pred_check
      _
    $region23: #{channel_attention_forward.1} parent=1 // pred_check_branch
      %629 = sbr.rel (0) target = $region25
    $region24: #{channel_attention_forward.1} parent=1 // pred_region
      %s631 = ssub.s32 32, 32
      %632 = vsyncadd [#allocation7], %s631
      %s634 = sshll.u32 [#allocation6], 4
      %s635 = int_to_ptr.vmem [resolvable:$true] %s634
      %637 = dma.vmem_to_hbm [thread:$0]  %s635, 32, %s4, [#allocation7]
    $region25: #{channel_attention_forward.1} parent=1 // pred_fallthru
      _
    // Predicated region
    $region26: #{channel_attention_forward.1} parent=1 // pred_check
      _
    $region27: #{channel_attention_forward.1} parent=1 // pred_check_branch
      %639 = sbr.rel (0) target = $region29
    $region28: #{channel_attention_forward.1} parent=1 // pred_region
      %640 = dma.done [#allocation4], 2048
    $region29: #{channel_attention_forward.1} parent=1 // pred_fallthru
      _
    // Predicated region
    $region30: #{channel_attention_forward.1} parent=1 // pred_check
      _
    $region31: #{channel_attention_forward.1} parent=1 // pred_check_branch
      %642 = sbr.rel (0) target = $region33
    $region32: #{channel_attention_forward.1} parent=1 // pred_region
      %643 = dma.done [#allocation7], 32
    $region33: #{channel_attention_forward.1} parent=1 // pred_fallthru
      _
    %644 = vsyncpa [#allocation3], 1
    %645 = vsyncpa [#allocation4], 1
    %646 = vsyncpa [#allocation7], 1

</llo_original>
